<compile_context>
chip_gen: v7x
topology: tpu7x:2x2x1
jax: 0.10.0
libtpu: 0.0.40
codegen_flags: <defaults>
</compile_context>

<pallas_src>
import jax
import jax.numpy as jnp
from jax.experimental import pallas as pl
from jax.experimental.pallas import tpu as pltpu

LANE = 128      # fused hidden width (both heads packed), lane-dense
OUT_PAD = 8     # narrow output slab: q1 -> col 0, q2 -> col 1, cols 2..7 zero


def _round_up(x, m):
    return -(-x // m) * m


# ----------------------------- Pallas kernel --------------------------------
def double_q_kernel(obs_ref, act_ref,
                    w1o_ref, w1a_ref, b1_ref,
                    w2_ref, b2_ref,
                    w3_ref, b3_ref,
                    out_ref):
    """Fused double-Q MLP on one (TB, *) batch tile. Weights are VMEM-resident."""
    # bf16 operands into the MXU, f32 accumulation; bias/ReLU on the VPU in f32.
    # If the producer already emits bf16 obs/action these casts are no-ops.
    obs = obs_ref[...].astype(jnp.bfloat16)
    act = act_ref[...].astype(jnp.bfloat16)

    # Layer 1 (both heads fused, 128-lane padded). Split-dot replaces the
    # wrapper-side concat([obs, action]); MXU has large slack, so the extra
    # dot + f32 add is not on the critical path.
    h = (jnp.dot(obs, w1o_ref[...], preferred_element_type=jnp.float32)
         + jnp.dot(act, w1a_ref[...], preferred_element_type=jnp.float32)
         + b1_ref[...])
    h = jnp.maximum(h, 0.0)

    # Layer 2: block-diagonal packed (128, 128) -> single lane-dense dot.
    h = (jnp.dot(h.astype(jnp.bfloat16), w2_ref[...],
                 preferred_element_type=jnp.float32) + b2_ref[...])
    h = jnp.maximum(h, 0.0)

    # Layer 3: narrow (128, 8) weight tile; q1 in column 0, q2 in column 1.
    # Writing (TB, 8) instead of a dense (TB, 128) slab cuts output HBM 16x.
    out_ref[...] = (jnp.dot(h.astype(jnp.bfloat16), w3_ref[...],
                            preferred_element_type=jnp.float32) + b3_ref[...])


# --------------------------- host-side weight packing ------------------------
def pack_double_q_params(p1, p2, obs_dim, action_dim, hidden_dim, pad=LANE):
    """Pack per-head params (weights stored (in, out)) into fused bf16 tiles.

    Invariant relied on by the wrapper slices: all padding (hidden lanes
    2H..127 and output columns 2..7) is exactly zero, so the padded output
    columns carry no garbage.
    """
    (w1_1, b1_1, w2_1, b2_1, w3_1, b3_1) = p1
    (w1_2, b1_2, w2_2, b2_2, w3_2, b3_2) = p2
    H = hidden_dim
    # Scope limitation of the fused-128-lane packing (typical small critics).
    assert 2 * H <= pad, "fused packing requires 2*hidden_dim <= 128"
    in_dim = obs_dim + action_dim

    # Fused first layer: (in_dim, pad); cols [0:H] head1, [H:2H] head2.
    w1 = jnp.zeros((in_dim, pad), jnp.float32)
    w1 = w1.at[:, :H].set(w1_1).at[:, H:2 * H].set(w1_2)
    w1_obs, w1_act = w1[:obs_dim], w1[obs_dim:]
    b1 = jnp.zeros((1, pad), jnp.float32).at[:, :H].set(b1_1).at[:, H:2 * H].set(b1_2)

    # Block-diagonal second layer: (pad, pad).
    w2 = jnp.zeros((pad, pad), jnp.float32)
    w2 = w2.at[:H, :H].set(w2_1).at[H:2 * H, H:2 * H].set(w2_2)
    b2 = jnp.zeros((1, pad), jnp.float32).at[:, :H].set(b2_1).at[:, H:2 * H].set(b2_2)

    # Third layer: narrow (pad, OUT_PAD); q1 -> column 0, q2 -> column 1.
    w3 = jnp.zeros((pad, OUT_PAD), jnp.float32)
    w3 = w3.at[:H, 0:1].set(w3_1).at[H:2 * H, 1:2].set(w3_2)
    b3 = jnp.zeros((1, OUT_PAD), jnp.float32).at[:, 0:1].set(b3_1).at[:, 1:2].set(b3_2)

    bf16 = lambda a: a.astype(jnp.bfloat16)
    return (bf16(w1_obs), bf16(w1_act), b1, bf16(w2), b2, bf16(w3), b3)


# ------------------------------ JAX wrapper ----------------------------------
def double_q_critic_forward(obs, action, packed_params, *, tb_max=4096):
    """obs: (B, obs_dim), action: (B, action_dim). Returns (q1, q2) each (B, 1).

    obs/action may be f32 or bf16; bf16 halves the input HBM read (the cast in
    the kernel becomes a no-op).
    """
    assert obs.shape[0] == action.shape[0]
    B, obs_dim = obs.shape
    action_dim = action.shape[1]
    (w1o, w1a, b1, w2, b2, w3, b3) = packed_params
    p_out = w3.shape[1]

    # Batch tiling:
    #  * sublane-align the batch,
    #  * use >= 2 grid steps whenever possible so the "parallel" batch axis
    #    actually spans both v7x TensorCores (single TC on v5e/v6e: no cost),
    #  * cap at tb_max (per-step VMEM stays a few MiB even at tb=4096, well
    #    under the scoped-VMEM default on every generation).
    bp = _round_up(max(B, 1), 8)
    tb = min(tb_max, max(8, _round_up(-(-bp // 2), 8)))
    bp = _round_up(bp, tb)
    if bp != B:
        obs = jnp.pad(obs, ((0, bp - B), (0, 0)))
        action = jnp.pad(action, ((0, bp - B), (0, 0)))
    grid = (bp // tb,)

    def weight_spec(shape):
        # Constant index_map -> tile stays VMEM-resident across grid steps.
        return pl.BlockSpec(shape, lambda i: (0, 0))

    in_bytes = obs.dtype.itemsize
    flops = 2 * bp * (w1o.shape[0] * w1o.shape[1] + w1a.shape[0] * w1a.shape[1]
                      + w2.shape[0] * w2.shape[1] + w3.shape[0] * w3.shape[1])
    bytes_accessed = (in_bytes * (obs.size + action.size) + 4 * bp * p_out
                      + 2 * (w1o.size + w1a.size + w2.size + w3.size)
                      + 4 * (b1.size + b2.size + b3.size))

    out = pl.pallas_call(
        double_q_kernel,
        out_shape=jax.ShapeDtypeStruct((bp, p_out), jnp.float32),
        grid=grid,
        in_specs=[
            pl.BlockSpec((tb, obs_dim), lambda i: (i, 0)),
            pl.BlockSpec((tb, action_dim), lambda i: (i, 0)),
            weight_spec(w1o.shape), weight_spec(w1a.shape), weight_spec(b1.shape),
            weight_spec(w2.shape), weight_spec(b2.shape),
            weight_spec(w3.shape), weight_spec(b3.shape),
        ],
        out_specs=pl.BlockSpec((tb, p_out), lambda i: (i, 0)),
        compiler_params=pltpu.CompilerParams(
            dimension_semantics=("parallel",)),
        cost_estimate=pl.CostEstimate(flops=flops, transcendentals=0,
                                      bytes_accessed=bytes_accessed),
    )(obs, action, w1o, w1a, b1, w2, b2, w3, b3)

    # Narrow (bp, 8) store in-kernel; split the two heads here (layout
    # plumbing only; columns 2..7 are zero by the packing invariant).
    q1 = out[:B, 0:1]
    q2 = out[:B, 1:2]
    return q1, q2


# ------------------------ deterministic parameter init -----------------------
def orthogonal_init(key, out_dim, in_dim):
    """Mimics nn.init.orthogonal_ on a (out_dim, in_dim) weight (deterministic)."""
    n = max(out_dim, in_dim)
    a = jax.random.normal(key, (n, n), dtype=jnp.float32)
    q, r = jnp.linalg.qr(a)
    q = q * jnp.sign(jnp.diag(r))[None, :]
    return q[:out_dim, :in_dim]


def make_mlp_params(key, in_dim, hidden_dim, out_dim):
    """Flat tuple (w1, b1, w2, b2, w3, b3) with weights stored as (in, out)."""
    k1, k2, k3 = jax.random.split(key, 3)
    w1 = orthogonal_init(k1, hidden_dim, in_dim).T            # (in, hidden)
    w2 = orthogonal_init(k2, hidden_dim, hidden_dim).T        # (hidden, hidden)
    w3 = orthogonal_init(k3, out_dim, hidden_dim).T           # (hidden, 1)
    b1 = jnp.zeros((1, hidden_dim), jnp.float32)
    b2 = jnp.zeros((1, hidden_dim), jnp.float32)
    b3 = jnp.zeros((1, out_dim), jnp.float32)
    return (w1, b1, w2, b2, w3, b3)


# ------------------------------- reference -----------------------------------
def reference_forward(obs, action, p1, p2):
    x = jnp.concatenate([obs, action], axis=-1)

    def qnet(p):
        w1, b1, w2, b2, w3, b3 = p
        h = jnp.maximum(x @ w1 + b1, 0.0)
        h = jnp.maximum(h @ w2 + b2, 0.0)
        return h @ w3 + b3

    return qnet(p1), qnet(p2)


if __name__ == "__main__":
    # TODO(synk): only the method='MLP' branch is implemented; the 'GPT' branch
    # depends on an external GPT module and has no in-script equivalent.
    batch, obs_dim, action_dim, hidden_dim = 8, 24, 8, 32
    in_dim = obs_dim + action_dim

    key = jax.random.PRNGKey(0)
    k_obs, k_act, k_q1, k_q2 = jax.random.split(key, 4)

    obs = jax.random.normal(k_obs, (batch, obs_dim), dtype=jnp.float32)
    action = jax.random.normal(k_act, (batch, action_dim), dtype=jnp.float32)

    params_q1 = make_mlp_params(k_q1, in_dim, hidden_dim, 1)
    params_q2 = make_mlp_params(k_q2, in_dim, hidden_dim, 1)
    packed = pack_double_q_params(params_q1, params_q2,
                                  obs_dim, action_dim, hidden_dim)

    q1, q2 = double_q_critic_forward(obs, action, packed)
    jax.block_until_ready((q1, q2))

    # Correctness vs pure-f32 reference (tolerance loosened for bf16 MXU operands).
    r1, r2 = reference_forward(obs, action, params_q1, params_q2)
    assert q1.shape == (batch, 1) and q2.shape == (batch, 1)
    assert jnp.allclose(q1, r1, atol=5e-2, rtol=5e-2), float(jnp.max(jnp.abs(q1 - r1)))
    assert jnp.allclose(q2, r2, atol=5e-2, rtol=5e-2), float(jnp.max(jnp.abs(q2 - r2)))

    print("KERNEL_OK")
</pallas_src>

<mosaic_0001>
module attributes {stable_mosaic.version = 11 : i64} {
  func.func @double_q_kernel(%arg0: i32, %arg1: memref<8x24xf32, #tpu.memory_space<vmem>>, %arg2: memref<8x8xf32, #tpu.memory_space<vmem>>, %arg3: memref<24x128xbf16, #tpu.memory_space<vmem>>, %arg4: memref<8x128xbf16, #tpu.memory_space<vmem>>, %arg5: memref<1x128xf32, #tpu.memory_space<vmem>>, %arg6: memref<128x128xbf16, #tpu.memory_space<vmem>>, %arg7: memref<1x128xf32, #tpu.memory_space<vmem>>, %arg8: memref<128x8xbf16, #tpu.memory_space<vmem>>, %arg9: memref<1x8xf32, #tpu.memory_space<vmem>>, %arg10: memref<8x8xf32, #tpu.memory_space<vmem>>) attributes {dimension_semantics = [#tpu.dimension_semantics<parallel>], iteration_bounds = array<i64: 1>, scalar_prefetch = 0 : i64, scratch_operands = 0 : i64, tpu.core_type = #tpu.core_type<tc>, window_params = [{transform_indices = @transform_0, window_bounds = array<i64: 8, 24>}, {transform_indices = @transform_1, window_bounds = array<i64: 8, 8>}, {pipeline_mode = #tpu.pipeline_mode<synchronous>, transform_indices = @transform_2, window_bounds = array<i64: 24, 128>}, {pipeline_mode = #tpu.pipeline_mode<synchronous>, transform_indices = @transform_3, window_bounds = array<i64: 8, 128>}, {pipeline_mode = #tpu.pipeline_mode<synchronous>, transform_indices = @transform_4, window_bounds = array<i64: 1, 128>}, {pipeline_mode = #tpu.pipeline_mode<synchronous>, transform_indices = @transform_5, window_bounds = array<i64: 128, 128>}, {pipeline_mode = #tpu.pipeline_mode<synchronous>, transform_indices = @transform_6, window_bounds = array<i64: 1, 128>}, {pipeline_mode = #tpu.pipeline_mode<synchronous>, transform_indices = @transform_7, window_bounds = array<i64: 128, 8>}, {pipeline_mode = #tpu.pipeline_mode<synchronous>, transform_indices = @transform_8, window_bounds = array<i64: 1, 8>}, {transform_indices = @transform_9, window_bounds = array<i64: 8, 8>}]} {
    %c0 = arith.constant 0 : index
    %c0_0 = arith.constant 0 : index
    %0 = vector.load %arg1[%c0, %c0_0] : memref<8x24xf32, #tpu.memory_space<vmem>>, vector<8x24xf32>
    %1 = arith.truncf %0 : vector<8x24xf32> to vector<8x24xbf16>
    %c0_1 = arith.constant 0 : index
    %c0_2 = arith.constant 0 : index
    %2 = vector.load %arg2[%c0_1, %c0_2] : memref<8x8xf32, #tpu.memory_space<vmem>>, vector<8x8xf32>
    %3 = arith.truncf %2 : vector<8x8xf32> to vector<8x8xbf16>
    %c0_3 = arith.constant 0 : index
    %c0_4 = arith.constant 0 : index
    %4 = vector.load %arg3[%c0_3, %c0_4] : memref<24x128xbf16, #tpu.memory_space<vmem>>, vector<24x128xbf16>
    %cst = arith.constant dense<0.000000e+00> : vector<8x128xf32>
    %5 = tpu.matmul %1, %4, %cst {dimension_numbers = #tpu.dot_dimension_numbers<[1], [0], [0], [1], [0, 0, 1, 1], [], []>} : vector<8x24xbf16>, vector<24x128xbf16>, vector<8x128xf32> -> vector<8x128xf32>
    %c0_5 = arith.constant 0 : index
    %c0_6 = arith.constant 0 : index
    %6 = vector.load %arg4[%c0_5, %c0_6] : memref<8x128xbf16, #tpu.memory_space<vmem>>, vector<8x128xbf16>
    %cst_7 = arith.constant dense<0.000000e+00> : vector<8x128xf32>
    %7 = tpu.matmul %3, %6, %cst_7 {dimension_numbers = #tpu.dot_dimension_numbers<[1], [0], [0], [1], [0, 0, 1, 1], [], []>} : vector<8x8xbf16>, vector<8x128xbf16>, vector<8x128xf32> -> vector<8x128xf32>
    %8 = arith.addf %5, %7 : vector<8x128xf32>
    %c0_8 = arith.constant 0 : index
    %c0_9 = arith.constant 0 : index
    %9 = vector.load %arg5[%c0_8, %c0_9] : memref<1x128xf32, #tpu.memory_space<vmem>>, vector<1x128xf32>
    %10 = vector.broadcast %9 : vector<1x128xf32> to vector<8x128xf32>
    %11 = arith.addf %8, %10 : vector<8x128xf32>
    %cst_10 = arith.constant 0.000000e+00 : f32
    %12 = vector.broadcast %cst_10 : f32 to vector<8x128xf32>
    %13 = arith.maximumf %11, %12 : vector<8x128xf32>
    %14 = arith.truncf %13 : vector<8x128xf32> to vector<8x128xbf16>
    %c0_11 = arith.constant 0 : index
    %c0_12 = arith.constant 0 : index
    %15 = vector.load %arg6[%c0_11, %c0_12] : memref<128x128xbf16, #tpu.memory_space<vmem>>, vector<128x128xbf16>
    %cst_13 = arith.constant dense<0.000000e+00> : vector<8x128xf32>
    %16 = tpu.matmul %14, %15, %cst_13 {dimension_numbers = #tpu.dot_dimension_numbers<[1], [0], [0], [1], [0, 0, 1, 1], [], []>} : vector<8x128xbf16>, vector<128x128xbf16>, vector<8x128xf32> -> vector<8x128xf32>
    %c0_14 = arith.constant 0 : index
    %c0_15 = arith.constant 0 : index
    %17 = vector.load %arg7[%c0_14, %c0_15] : memref<1x128xf32, #tpu.memory_space<vmem>>, vector<1x128xf32>
    %18 = vector.broadcast %17 : vector<1x128xf32> to vector<8x128xf32>
    %19 = arith.addf %16, %18 : vector<8x128xf32>
    %cst_16 = arith.constant 0.000000e+00 : f32
    %20 = vector.broadcast %cst_16 : f32 to vector<8x128xf32>
    %21 = arith.maximumf %19, %20 : vector<8x128xf32>
    %22 = arith.truncf %21 : vector<8x128xf32> to vector<8x128xbf16>
    %c0_17 = arith.constant 0 : index
    %c0_18 = arith.constant 0 : index
    %23 = vector.load %arg8[%c0_17, %c0_18] : memref<128x8xbf16, #tpu.memory_space<vmem>>, vector<128x8xbf16>
    %cst_19 = arith.constant dense<0.000000e+00> : vector<8x8xf32>
    %24 = tpu.matmul %22, %23, %cst_19 {dimension_numbers = #tpu.dot_dimension_numbers<[1], [0], [0], [1], [0, 0, 1, 1], [], []>} : vector<8x128xbf16>, vector<128x8xbf16>, vector<8x8xf32> -> vector<8x8xf32>
    %c0_20 = arith.constant 0 : index
    %c0_21 = arith.constant 0 : index
    %25 = vector.load %arg9[%c0_20, %c0_21] : memref<1x8xf32, #tpu.memory_space<vmem>>, vector<1x8xf32>
    %26 = vector.broadcast %25 : vector<1x8xf32> to vector<8x8xf32>
    %27 = arith.addf %24, %26 : vector<8x8xf32>
    %c0_22 = arith.constant 0 : index
    %c0_23 = arith.constant 0 : index
    %28 = vector.load %arg10[%c0_22, %c0_23] : memref<8x8xf32, #tpu.memory_space<vmem>>, vector<8x8xf32>
    tpu.vector_store %arg10[%c0_22, %c0_23], %27 {strides = array<i32>} : memref<8x8xf32, #tpu.memory_space<vmem>>, vector<8x8xf32>,
    return
  }
  func.func @transform_0(%arg0: i32) -> (i32, i32) {
    %c0_i32 = arith.constant 0 : i32
    %c0_i32_0 = arith.constant 0 : i32
    return %arg0, %c0_i32 : i32, i32
  }
  func.func @transform_1(%arg0: i32) -> (i32, i32) {
    %c0_i32 = arith.constant 0 : i32
    %c0_i32_0 = arith.constant 0 : i32
    return %arg0, %c0_i32 : i32, i32
  }
  func.func @transform_2(%arg0: i32) -> (i32, i32) {
    %c0_i32 = arith.constant 0 : i32
    %c0_i32_0 = arith.constant 0 : i32
    %c0_i32_1 = arith.constant 0 : i32
    return %c0_i32, %c0_i32_0 : i32, i32
  }
  func.func @transform_3(%arg0: i32) -> (i32, i32) {
    %c0_i32 = arith.constant 0 : i32
    %c0_i32_0 = arith.constant 0 : i32
    %c0_i32_1 = arith.constant 0 : i32
    return %c0_i32, %c0_i32_0 : i32, i32
  }
  func.func @transform_4(%arg0: i32) -> (i32, i32) {
    %c0_i32 = arith.constant 0 : i32
    %c0_i32_0 = arith.constant 0 : i32
    %c0_i32_1 = arith.constant 0 : i32
    return %c0_i32, %c0_i32_0 : i32, i32
  }
  func.func @transform_5(%arg0: i32) -> (i32, i32) {
    %c0_i32 = arith.constant 0 : i32
    %c0_i32_0 = arith.constant 0 : i32
    %c0_i32_1 = arith.constant 0 : i32
    return %c0_i32, %c0_i32_0 : i32, i32
  }
  func.func @transform_6(%arg0: i32) -> (i32, i32) {
    %c0_i32 = arith.constant 0 : i32
    %c0_i32_0 = arith.constant 0 : i32
    %c0_i32_1 = arith.constant 0 : i32
    return %c0_i32, %c0_i32_0 : i32, i32
  }
  func.func @transform_7(%arg0: i32) -> (i32, i32) {
    %c0_i32 = arith.constant 0 : i32
    %c0_i32_0 = arith.constant 0 : i32
    %c0_i32_1 = arith.constant 0 : i32
    return %c0_i32, %c0_i32_0 : i32, i32
  }
  func.func @transform_8(%arg0: i32) -> (i32, i32) {
    %c0_i32 = arith.constant 0 : i32
    %c0_i32_0 = arith.constant 0 : i32
    %c0_i32_1 = arith.constant 0 : i32
    return %c0_i32, %c0_i32_0 : i32, i32
  }
  func.func @transform_9(%arg0: i32) -> (i32, i32) {
    %c0_i32 = arith.constant 0 : i32
    %c0_i32_0 = arith.constant 0 : i32
    return %arg0, %c0_i32 : i32, i32
  }
}

</mosaic_0001>

<llo_original>
// kernel: tpu_custom_call.1
$region0: #{tpu_custom_call.1}
  #allocation0 [shape = 'u32[]', space=smem, size = 0x4, offset = 0x4, fixed_abs, tag = 'smem constant byte address 0x4 - core index']
  #allocation1 [shape = 'u32[144,128]{1,0:T(1,128)}', space=vmem, size = 0x12000, scoped, tag = 'internal scratch']
  %s0 = inlined_call_operand.vmem [shape: f32[8,24], index: 0, kind: input, shape index: {}]
  %s1 = inlined_call_operand.hbm [shape: f32[8,8], index: 1, kind: input, shape index: {}]
  %s2 = inlined_call_operand.vmem [shape: bf16[24,128], index: 2, kind: input, shape index: {}]
  %s3 = inlined_call_operand.hbm [shape: bf16[8,128], index: 3, kind: input, shape index: {}]
  %s4 = inlined_call_operand.vmem [shape: f32[1,128], index: 4, kind: input, shape index: {}]
  %s5 = inlined_call_operand.vmem [shape: bf16[128,128], index: 5, kind: input, shape index: {}]
  %s6 = inlined_call_operand.vmem [shape: f32[1,128], index: 6, kind: input, shape index: {}]
  %s7 = inlined_call_operand.vmem [shape: bf16[128,8], index: 7, kind: input, shape index: {}]
  %s8 = inlined_call_operand.vmem [shape: f32[1,8], index: 8, kind: input, shape index: {}]
  %s9 = inlined_call_operand.hbm [shape: f32[8,8], index: 9, kind: output, shape index: {}]
  %s10 = sld [smem:[#allocation0]]
  $region54: #{tpu_custom_call.1} parent=0
    _
  %s12 = ssub.s32 1, %s10
  %s13 = scalar_select 0, %s12, %s10
  $region1: #{tpu_custom_call.1} parent=0
    #allocation2 [shape = 'u8[4096]{0}', space=vmem, size = 0x1000, scoped, tag = 'input window, operand 1, single buffered']
    #allocation3 [shape = 's32[1]{0}', space=sflag, size = 0x4, scoped, tag = 'scoped memory for tpu_custom_call.1']
    #allocation4 [shape = 's32[1]{0}', space=sflag, size = 0x4, scoped, tag = 'scoped memory for tpu_custom_call.1']
    #allocation5 [shape = 'u8[2048]{0}', space=vmem, size = 0x800, scoped, tag = 'input window, operand 3, single buffered']
    #allocation6 [shape = 's32[1]{0}', space=sflag, size = 0x4, scoped, tag = 'scoped memory for tpu_custom_call.1']
    #allocation7 [shape = 'u8[4096]{0}', space=vmem, size = 0x1000, scoped, tag = 'output window, operand 0, single buffered']
    %14 = vsyncpa [#allocation3], 0
    %15 = vsyncpa [#allocation6], 0
    %16 = vsyncpa [#allocation4], 0
    // Predicated region
    $region2: #{tpu_custom_call.1} parent=1 // pred_check
      _
    $region3: #{tpu_custom_call.1} parent=1 // pred_check_branch
      %18 = sbr.rel (0) target = $region5
    $region4: #{tpu_custom_call.1} parent=1 // pred_region
      _
    $region5: #{tpu_custom_call.1} parent=1 // pred_fallthru
      _
    // Predicated region
    $region6: #{tpu_custom_call.1} parent=1 // pred_check
      _
    $region7: #{tpu_custom_call.1} parent=1 // pred_check_branch
      %20 = sbr.rel (0) target = $region9
    $region8: #{tpu_custom_call.1} parent=1 // pred_region
      %s22 = ssub.s32 128, 128
      %23 = vsyncadd [#allocation3], %s22
      %s25 = sshll.u32 [#allocation2], 4
      %s26 = int_to_ptr.vmem [resolvable:$true] %s25
      %28 = dma.hbm_to_vmem [thread:$0]  %s1, 128, %s26, [#allocation3]
    $region9: #{tpu_custom_call.1} parent=1 // pred_fallthru
      _
    // Predicated region
    $region10: #{tpu_custom_call.1} parent=1 // pred_check
      _
    $region11: #{tpu_custom_call.1} parent=1 // pred_check_branch
      %30 = sbr.rel (0) target = $region13
    $region12: #{tpu_custom_call.1} parent=1 // pred_region
      _
    $region13: #{tpu_custom_call.1} parent=1 // pred_fallthru
      _
    // Predicated region
    $region14: #{tpu_custom_call.1} parent=1 // pred_check
      _
    $region15: #{tpu_custom_call.1} parent=1 // pred_check_branch
      %32 = sbr.rel (0) target = $region17
    $region16: #{tpu_custom_call.1} parent=1 // pred_region
      %s34 = ssub.s32 64, 64
      %35 = vsyncadd [#allocation6], %s34
      %s37 = sshll.u32 [#allocation5], 4
      %s38 = int_to_ptr.vmem [resolvable:$true] %s37
      %40 = dma.hbm_to_vmem [thread:$0]  %s3, 64, %s38, [#allocation6]
    $region17: #{tpu_custom_call.1} parent=1 // pred_fallthru
      _
    // Predicated region
    $region18: #{tpu_custom_call.1} parent=1 // pred_check
      _
    $region19: #{tpu_custom_call.1} parent=1 // pred_check_branch
      %42 = sbr.rel (0) target = $region21
    $region20: #{tpu_custom_call.1} parent=1 // pred_region
      _
    $region21: #{tpu_custom_call.1} parent=1 // pred_fallthru
      _
    // Predicated region
    $region22: #{tpu_custom_call.1} parent=1 // pred_check
      _
    $region23: #{tpu_custom_call.1} parent=1 // pred_check_branch
      %44 = sbr.rel (0) target = $region25
    $region24: #{tpu_custom_call.1} parent=1 // pred_region
      _
    $region25: #{tpu_custom_call.1} parent=1 // pred_fallthru
      _
    // Predicated region
    $region26: #{tpu_custom_call.1} parent=1 // pred_check
      _
    $region27: #{tpu_custom_call.1} parent=1 // pred_check_branch
      %46 = sbr.rel (0) target = $region29
    $region28: #{tpu_custom_call.1} parent=1 // pred_region
      _
    $region29: #{tpu_custom_call.1} parent=1 // pred_fallthru
      _
    // Predicated region
    $region30: #{tpu_custom_call.1} parent=1 // pred_check
      _
    $region31: #{tpu_custom_call.1} parent=1 // pred_check_branch
      %48 = sbr.rel (0) target = $region33
    $region32: #{tpu_custom_call.1} parent=1 // pred_region
      _
    $region33: #{tpu_custom_call.1} parent=1 // pred_fallthru
      _
    // Predicated region
    $region34: #{tpu_custom_call.1} parent=1 // pred_check
      _
    $region35: #{tpu_custom_call.1} parent=1 // pred_check_branch
      %50 = sbr.rel (0) target = $region37
    $region36: #{tpu_custom_call.1} parent=1 // pred_region
      _
    $region37: #{tpu_custom_call.1} parent=1 // pred_fallthru
      _
    // Predicated region
    $region38: #{tpu_custom_call.1} parent=1 // pred_check
      _
    $region39: #{tpu_custom_call.1} parent=1 // pred_check_branch
      %52 = sbr.rel (0) target = $region41
    $region40: #{tpu_custom_call.1} parent=1 // pred_region
      %53 = dma.done [#allocation3], 128
    $region41: #{tpu_custom_call.1} parent=1 // pred_fallthru
      _
    // Predicated region
    $region42: #{tpu_custom_call.1} parent=1 // pred_check
      _
    $region43: #{tpu_custom_call.1} parent=1 // pred_check_branch
      %55 = sbr.rel (0) target = $region45
    $region44: #{tpu_custom_call.1} parent=1 // pred_region
      %56 = dma.done [#allocation6], 64
    $region45: #{tpu_custom_call.1} parent=1 // pred_fallthru
      _
    %v58 = vld [vmem:[%s0] sm:$0xff]
    %v59 = vpack.c.bf16 %v58, %v58
    %v60 = vld [vmem:[#allocation2] sm:$0xff]
    %v61 = vpack.c.bf16 %v60, %v60
    %v62 = vld [vmem:[%s2] sm:$0xf]
    %v63 = vld [vmem:[%s2 + $0x4] sm:$0xf]
    %v64 = vld [vmem:[%s2 + $0x8] sm:$0xf]
    %v65 = vld [vmem:[#allocation5] sm:$0xf]
    %vm66 = vcmask 64512
    %v68 = vsel %vm66, %v61, 0
    %vm70 = vcmask 1043456
    %v72 = vsel %vm70, %v65, 0
    %74 = vmatprep.subr.bf16.mxu0 0
    %75 = vmatpush1.bf16.msra.mxu0 %v72
    %76 = vmatprep.subr.bf16.mxu0 0
    %77 = vmatpush1.bf16.msra.mxu0 0
    %78 = vmatprep.subr.bf16.mxu0 0
    %79 = vmatpush1.bf16.msra.mxu0 0
    %80 = vmatprep.subr.bf16.mxu0 0
    %81 = vmatpush1.bf16.msra.mxu0 0
    %82 = vmatprep.subr.bf16.mxu0 0
    %83 = vmatpush1.bf16.msra.mxu0 0
    %84 = vmatprep.subr.bf16.mxu0 0
    %85 = vmatpush1.bf16.msra.mxu0 0
    %86 = vmatprep.subr.bf16.mxu0 0
    %87 = vmatpush1.bf16.msra.mxu0 0
    %88 = vmatprep.subr.bf16.mxu0 0
    %89 = vmatpush1.bf16.msra.mxu0 0
    %90 = vmatprep.subr.bf16.mxu0 0
    %91 = vmatpush1.bf16.msra.mxu0 0
    %92 = vmatprep.subr.bf16.mxu0 0
    %93 = vmatpush1.bf16.msra.mxu0 0
    %94 = vmatprep.subr.bf16.mxu0 0
    %95 = vmatpush1.bf16.msra.mxu0 0
    %96 = vmatprep.subr.bf16.mxu0 0
    %97 = vmatpush1.bf16.msra.mxu0 0
    %98 = vmatprep.subr.bf16.mxu0 0
    %99 = vmatpush1.bf16.msra.mxu0 0
    %100 = vmatprep.subr.bf16.mxu0 0
    %101 = vmatpush1.bf16.msra.mxu0 0
    %102 = vmatprep.subr.bf16.mxu0 0
    %103 = vmatpush1.bf16.msra.mxu0 0
    %104 = vmatprep.subr.bf16.mxu0 0
    %105 = vmatpush1.bf16.msra.mxu0 0
    %106 = vmatprep.mubr.bf16.mxu0 0
    %107 = vmatmul.mubr.bf16.gmra.mrb[0].mxu0 %v68
    %v108 = vpop.f32.mrb[0].mxu0
    %v109 = vadd.f32 0.0, %v108
    %v110 = vpop.f32.mrb[0].mxu0
    %v111 = vpop.f32.mrb[0].mxu0
    %v112 = vpop.f32.mrb[0].mxu0
    %113 = vdwg.mxu0
    %v117 = vunpack.c.l.b16 %v62
    %v118 = vunpack.c.l.b16 %v63
    %v119 = vunpack.c.l.b16 %v64
    %v120 = vpack.c.b16 %v118, %v117
    %v121 = vpack.c.b16 %v119, %v119
    %vm123 = vcmask 195584
    %v125 = vsel %vm123, %v59, 0
    %v128 = vsel %vm70, %v121, 0
    %130 = vmatprep.subr.bf16.mxu0 0
    %131 = vmatpush1.bf16.msra.mxu0 %v120
    %132 = vmatprep.subr.bf16.mxu0 0
    %133 = vmatpush1.bf16.msra.mxu0 %v128
    %134 = vmatprep.subr.bf16.mxu0 0
    %135 = vmatpush1.bf16.msra.mxu0 0
    %136 = vmatprep.subr.bf16.mxu0 0
    %137 = vmatpush1.bf16.msra.mxu0 0
    %138 = vmatprep.subr.bf16.mxu0 0
    %139 = vmatpush1.bf16.msra.mxu0 0
    %140 = vmatprep.subr.bf16.mxu0 0
    %141 = vmatpush1.bf16.msra.mxu0 0
    %142 = vmatprep.subr.bf16.mxu0 0
    %143 = vmatpush1.bf16.msra.mxu0 0
    %144 = vmatprep.subr.bf16.mxu0 0
    %145 = vmatpush1.bf16.msra.mxu0 0
    %146 = vmatprep.subr.bf16.mxu0 0
    %147 = vmatpush1.bf16.msra.mxu0 0
    %148 = vmatprep.subr.bf16.mxu0 0
    %149 = vmatpush1.bf16.msra.mxu0 0
    %150 = vmatprep.subr.bf16.mxu0 0
    %151 = vmatpush1.bf16.msra.mxu0 0
    %152 = vmatprep.subr.bf16.mxu0 0
    %153 = vmatpush1.bf16.msra.mxu0 0
    %154 = vmatprep.subr.bf16.mxu0 0
    %155 = vmatpush1.bf16.msra.mxu0 0
    %156 = vmatprep.subr.bf16.mxu0 0
    %157 = vmatpush1.bf16.msra.mxu0 0
    %158 = vmatprep.subr.bf16.mxu0 0
    %159 = vmatpush1.bf16.msra.mxu0 0
    %160 = vmatprep.subr.bf16.mxu0 0
    %161 = vmatpush1.bf16.msra.mxu0 0
    %162 = vmatprep.mubr.bf16.mxu0 0
    %163 = vmatmul.mubr.bf16.gmra.mrb[0].mxu0 %v125
    %v164 = vpop.f32.mrb[0].mxu0
    %v165 = vadd.f32 %v109, %v164
    %v166 = vpop.f32.mrb[0].mxu0
    %v167 = vpop.f32.mrb[0].mxu0
    %v168 = vpop.f32.mrb[0].mxu0
    %169 = vdwg.mxu0
    %v170 = vld [vmem:[%s4] sm:$0x1]
    %v172 = vlaneseq
    %v173 = vshrl.u32 %v172, 7
    %v174 = vsub.s32 0, %v173
    %v175 = vrot.slane %v170, %v174
    %v177 = vadd.f32 %v165, %v175
    %v178 = vmax.f32 %v177, 0.0
    %v179 = vpack.c.bf16 %v178, %v178
    %v180 = vld [vmem:[%s5] sm:$0xf]
    %v181 = vld [vmem:[%s5 + $0x4] sm:$0xf]
    %v182 = vld [vmem:[%s5 + $0x8] sm:$0xf]
    %v183 = vld [vmem:[%s5 + $0xc] sm:$0xf]
    %v184 = vld [vmem:[%s5 + $0x10] sm:$0xf]
    %v185 = vld [vmem:[%s5 + $0x14] sm:$0xf]
    %v186 = vld [vmem:[%s5 + $0x18] sm:$0xf]
    %v187 = vld [vmem:[%s5 + $0x1c] sm:$0xf]
    %v188 = vld [vmem:[%s5 + $0x20] sm:$0xf]
    %v189 = vld [vmem:[%s5 + $0x24] sm:$0xf]
    %v190 = vld [vmem:[%s5 + $0x28] sm:$0xf]
    %v191 = vld [vmem:[%s5 + $0x2c] sm:$0xf]
    %v192 = vld [vmem:[%s5 + $0x30] sm:$0xf]
    %v193 = vld [vmem:[%s5 + $0x34] sm:$0xf]
    %v194 = vld [vmem:[%s5 + $0x38] sm:$0xf]
    %v195 = vld [vmem:[%s5 + $0x3c] sm:$0xf]
    %v196 = vld [vmem:[%s6] sm:$0x1]
    %v198 = vlaneseq
    %v199 = vshrl.u32 %v198, 7
    %v200 = vsub.s32 0, %v199
    %v201 = vrot.slane %v196, %v200
    %v219 = vunpack.c.l.b16 %v180
    %v220 = vunpack.c.l.b16 %v181
    %v221 = vunpack.c.l.b16 %v182
    %v222 = vunpack.c.l.b16 %v183
    %v223 = vunpack.c.l.b16 %v184
    %v224 = vunpack.c.l.b16 %v185
    %v225 = vunpack.c.l.b16 %v186
    %v226 = vunpack.c.l.b16 %v187
    %v227 = vunpack.c.l.b16 %v188
    %v228 = vunpack.c.l.b16 %v189
    %v229 = vunpack.c.l.b16 %v190
    %v230 = vunpack.c.l.b16 %v191
    %v231 = vunpack.c.l.b16 %v192
    %v232 = vunpack.c.l.b16 %v193
    %v233 = vunpack.c.l.b16 %v194
    %v234 = vunpack.c.l.b16 %v195
    %v235 = vpack.c.b16 %v220, %v219
    %v236 = vpack.c.b16 %v222, %v221
    %v237 = vpack.c.b16 %v224, %v223
    %v238 = vpack.c.b16 %v226, %v225
    %v239 = vpack.c.b16 %v228, %v227
    %v240 = vpack.c.b16 %v230, %v229
    %v241 = vpack.c.b16 %v232, %v231
    %v242 = vpack.c.b16 %v234, %v233
    %251 = vmatprep.subr.bf16.mxu0 0
    %252 = vmatpush1.bf16.msra.mxu0 %v235
    %253 = vmatprep.subr.bf16.mxu0 0
    %254 = vmatpush1.bf16.msra.mxu0 %v236
    %255 = vmatprep.subr.bf16.mxu0 0
    %256 = vmatpush1.bf16.msra.mxu0 %v237
    %257 = vmatprep.subr.bf16.mxu0 0
    %258 = vmatpush1.bf16.msra.mxu0 %v238
    %259 = vmatprep.subr.bf16.mxu0 0
    %260 = vmatpush1.bf16.msra.mxu0 %v239
    %261 = vmatprep.subr.bf16.mxu0 0
    %262 = vmatpush1.bf16.msra.mxu0 %v240
    %263 = vmatprep.subr.bf16.mxu0 0
    %264 = vmatpush1.bf16.msra.mxu0 %v241
    %265 = vmatprep.subr.bf16.mxu0 0
    %266 = vmatpush1.bf16.msra.mxu0 %v242
    %267 = vmatprep.subr.bf16.mxu0 0
    %268 = vmatpush1.bf16.msra.mxu0 0
    %269 = vmatprep.subr.bf16.mxu0 0
    %270 = vmatpush1.bf16.msra.mxu0 0
    %271 = vmatprep.subr.bf16.mxu0 0
    %272 = vmatpush1.bf16.msra.mxu0 0
    %273 = vmatprep.subr.bf16.mxu0 0
    %274 = vmatpush1.bf16.msra.mxu0 0
    %275 = vmatprep.subr.bf16.mxu0 0
    %276 = vmatpush1.bf16.msra.mxu0 0
    %277 = vmatprep.subr.bf16.mxu0 0
    %278 = vmatpush1.bf16.msra.mxu0 0
    %279 = vmatprep.subr.bf16.mxu0 0
    %280 = vmatpush1.bf16.msra.mxu0 0
    %281 = vmatprep.subr.bf16.mxu0 0
    %282 = vmatpush1.bf16.msra.mxu0 0
    %283 = vmatprep.mubr.bf16.mxu0 0
    %284 = vmatmul.mubr.bf16.gmra.mrb[0].mxu0 %v179
    %v285 = vpop.f32.mrb[0].mxu0
    %v286 = vadd.f32 %v201, %v285
    %v287 = vpop.f32.mrb[0].mxu0
    %v288 = vpop.f32.mrb[0].mxu0
    %v289 = vpop.f32.mrb[0].mxu0
    %290 = vdwg.mxu0
    %v291 = vmax.f32 %v286, 0.0
    %v292 = vpack.c.bf16 %v291, %v291
    %v293 = vld [vmem:[%s7] sm:$0xf]
    %v294 = vld [vmem:[%s7 + $0x4] sm:$0xf]
    %v295 = vld [vmem:[%s7 + $0x8] sm:$0xf]
    %v296 = vld [vmem:[%s7 + $0xc] sm:$0xf]
    %v297 = vld [vmem:[%s7 + $0x10] sm:$0xf]
    %v298 = vld [vmem:[%s7 + $0x14] sm:$0xf]
    %v299 = vld [vmem:[%s7 + $0x18] sm:$0xf]
    %v300 = vld [vmem:[%s7 + $0x1c] sm:$0xf]
    %v301 = vld [vmem:[%s7 + $0x20] sm:$0xf]
    %v302 = vld [vmem:[%s7 + $0x24] sm:$0xf]
    %v303 = vld [vmem:[%s7 + $0x28] sm:$0xf]
    %v304 = vld [vmem:[%s7 + $0x2c] sm:$0xf]
    %v305 = vld [vmem:[%s7 + $0x30] sm:$0xf]
    %v306 = vld [vmem:[%s7 + $0x34] sm:$0xf]
    %v307 = vld [vmem:[%s7 + $0x38] sm:$0xf]
    %v308 = vld [vmem:[%s7 + $0x3c] sm:$0xf]
    %v309 = vld [vmem:[%s8] sm:$0x1]
    %v311 = vlaneseq
    %v312 = vshrl.u32 %v311, 7
    %v313 = vsub.s32 0, %v312
    %v314 = vrot.slane %v309, %v313
    %v332 = vunpack.c.l.b16 %v293
    %v333 = vunpack.c.l.b16 %v294
    %v334 = vunpack.c.l.b16 %v295
    %v335 = vunpack.c.l.b16 %v296
    %v336 = vunpack.c.l.b16 %v297
    %v337 = vunpack.c.l.b16 %v298
    %v338 = vunpack.c.l.b16 %v299
    %v339 = vunpack.c.l.b16 %v300
    %v340 = vunpack.c.l.b16 %v301
    %v341 = vunpack.c.l.b16 %v302
    %v342 = vunpack.c.l.b16 %v303
    %v343 = vunpack.c.l.b16 %v304
    %v344 = vunpack.c.l.b16 %v305
    %v345 = vunpack.c.l.b16 %v306
    %v346 = vunpack.c.l.b16 %v307
    %v347 = vunpack.c.l.b16 %v308
    %v348 = vpack.c.b16 %v333, %v332
    %v349 = vpack.c.b16 %v335, %v334
    %v350 = vpack.c.b16 %v337, %v336
    %v351 = vpack.c.b16 %v339, %v338
    %v352 = vpack.c.b16 %v341, %v340
    %v353 = vpack.c.b16 %v343, %v342
    %v354 = vpack.c.b16 %v345, %v344
    %v355 = vpack.c.b16 %v347, %v346
    %364 = vmatprep.subr.bf16.mxu0 0
    %365 = vmatpush1.bf16.msra.mxu0 %v348
    %366 = vmatprep.subr.bf16.mxu0 0
    %367 = vmatpush1.bf16.msra.mxu0 %v349
    %368 = vmatprep.subr.bf16.mxu0 0
    %369 = vmatpush1.bf16.msra.mxu0 %v350
    %370 = vmatprep.subr.bf16.mxu0 0
    %371 = vmatpush1.bf16.msra.mxu0 %v351
    %372 = vmatprep.subr.bf16.mxu0 0
    %373 = vmatpush1.bf16.msra.mxu0 %v352
    %374 = vmatprep.subr.bf16.mxu0 0
    %375 = vmatpush1.bf16.msra.mxu0 %v353
    %376 = vmatprep.subr.bf16.mxu0 0
    %377 = vmatpush1.bf16.msra.mxu0 %v354
    %378 = vmatprep.subr.bf16.mxu0 0
    %379 = vmatpush1.bf16.msra.mxu0 %v355
    %380 = vmatprep.subr.bf16.mxu0 0
    %381 = vmatpush1.bf16.msra.mxu0 0
    %382 = vmatprep.subr.bf16.mxu0 0
    %383 = vmatpush1.bf16.msra.mxu0 0
    %384 = vmatprep.subr.bf16.mxu0 0
    %385 = vmatpush1.bf16.msra.mxu0 0
    %386 = vmatprep.subr.bf16.mxu0 0
    %387 = vmatpush1.bf16.msra.mxu0 0
    %388 = vmatprep.subr.bf16.mxu0 0
    %389 = vmatpush1.bf16.msra.mxu0 0
    %390 = vmatprep.subr.bf16.mxu0 0
    %391 = vmatpush1.bf16.msra.mxu0 0
    %392 = vmatprep.subr.bf16.mxu0 0
    %393 = vmatpush1.bf16.msra.mxu0 0
    %394 = vmatprep.subr.bf16.mxu0 0
    %395 = vmatpush1.bf16.msra.mxu0 0
    %396 = vmatprep.mubr.bf16.mxu0 0
    %397 = vmatmul.mubr.bf16.gmra.mrb[0].mxu0 %v292
    %v398 = vpop.f32.mrb[0].mxu0
    %v399 = vadd.f32 %v314, %v398
    %v400 = vpop.f32.mrb[0].mxu0
    %v401 = vpop.f32.mrb[0].mxu0
    %v402 = vpop.f32.mrb[0].mxu0
    %403 = vdwg.mxu0
    %404 = vst.msk [vmem:[#allocation7] sm:$0xff] %vm66, %v399
    // Predicated region
    $region46: #{tpu_custom_call.1} parent=1 // pred_check
      _
    $region47: #{tpu_custom_call.1} parent=1 // pred_check_branch
      %406 = sbr.rel (0) target = $region49
    $region48: #{tpu_custom_call.1} parent=1 // pred_region
      %s408 = ssub.s32 128, 128
      %409 = vsyncadd [#allocation4], %s408
      %s411 = sshll.u32 [#allocation7], 4
      %s412 = int_to_ptr.vmem [resolvable:$true] %s411
      %414 = dma.vmem_to_hbm [thread:$0]  %s412, 128, %s9, [#allocation4]
    $region49: #{tpu_custom_call.1} parent=1 // pred_fallthru
      _
    // Predicated region
    $region50: #{tpu_custom_call.1} parent=1 // pred_check
      _
    $region51: #{tpu_custom_call.1} parent=1 // pred_check_branch
      %416 = sbr.rel (0) target = $region53
    $region52: #{tpu_custom_call.1} parent=1 // pred_region
      %417 = dma.done [#allocation4], 128
    $region53: #{tpu_custom_call.1} parent=1 // pred_fallthru
      _
    %418 = vsyncpa [#allocation3], 1
    %419 = vsyncpa [#allocation6], 1
    %420 = vsyncpa [#allocation4], 1

</llo_original>
